<compile_context>
chip_gen: v6e
topology: v6e:2x2x1
jax: 0.10.0
libtpu: 0.0.40
codegen_flags: <defaults>
</compile_context>

<pallas_src>
import functools
import math

import jax
import jax.numpy as jnp
from jax.experimental import pallas as pl
from jax.experimental.pallas import tpu as pltpu


def _round_up(x, m):
    return (x + m - 1) // m * m


def _cdiv(a, b):
    return (a + b - 1) // b


# ----------------------------------------------------------------------------
# Pallas kernel: fused matmul + affine offsets + L2 norm + alpha scale + the
# in-kernel "concat" (virtual logit written into lane K of the padded output).
# ----------------------------------------------------------------------------
def _vim_kernel(x_ref, rhs_ref, off_ref, alpha_ref, out_ref, *,
                num_classes, k_pad, compute_dtype):
    # Cast the x tile to the MXU compute dtype inside VMEM (cheap VPU pass);
    # the wrapper never copies / pads / casts x in HBM.
    x = x_ref[...].astype(compute_dtype)                        # (TB, C)
    # Single MXU product against the fused [W.T | orthogonal_space] matrix.
    acc = jnp.dot(x, rhs_ref[...],
                  preferred_element_type=jnp.float32)           # (TB, K_pad+C) f32
    # bias and -(u @ OS) are packed into one precomputed offsets row, so the
    # whole affine epilogue is a single broadcast VPU add:
    #   acc[:, :K_pad] -> x@W.T + b ;  acc[:, K_pad:] -> (x - u)@OS
    acc = acc + off_ref[...]
    proj = acc[:, k_pad:]                                       # (TB, C)
    vlogit = jnp.sqrt(jnp.sum(proj * proj, axis=-1,
                              keepdims=True)) * alpha_ref[0, 0]  # (TB, 1)
    # Lane-dense bulk store of the (padded) class logits, then a single narrow
    # masked store drops the virtual logit into lane `num_classes`.
    # (Column K of acc is exactly zero by construction, so ordering is the only
    #  thing that matters; Pallas preserves store order on the same ref.)
    out_ref[...] = acc[:, :k_pad].astype(out_ref.dtype)
    out_ref[:, num_classes:num_classes + 1] = vlogit.astype(out_ref.dtype)


# ----------------------------------------------------------------------------
# One-time parameter packing (hoisted out of the per-call path).
# ----------------------------------------------------------------------------
def prepare_vim_params(w, b, u, orthogonal_space, alpha, *,
                       compute_dtype=jnp.bfloat16):
    """Pack ViM parameters for the kernel. Call once, reuse for every forward.

    Returns a dict with:
      rhs     : (C, K_pad + C) compute_dtype   = [ W.T (zero-padded) | OS ]
      offsets : (1, K_pad + C) f32             = [ b (zero-padded)   | -(u @ OS) ]
      alpha   : (1, 1) f32
      plus static ints num_classes / n_channels / k_pad.
    """
    w = jnp.asarray(w, jnp.float32)
    b = jnp.asarray(b, jnp.float32)
    u = jnp.asarray(u, jnp.float32)
    os_ = jnp.asarray(orthogonal_space, jnp.float32)
    K, C = w.shape
    k_pad = _round_up(K + 1, 128)                     # lane-dense output width
    wt_pad = jnp.zeros((C, k_pad), jnp.float32).at[:, :K].set(w.T)
    rhs = jnp.concatenate([wt_pad, os_], axis=1).astype(compute_dtype)
    b_pad = jnp.zeros((k_pad,), jnp.float32).at[:K].set(b)
    u_proj = (u.reshape(1, C) @ os_).reshape(C)       # u @ OS, kept in f32
    offsets = jnp.concatenate([b_pad, -u_proj]).reshape(1, k_pad + C)
    alpha2 = jnp.asarray(alpha, jnp.float32).reshape(1, 1)
    return {
        "rhs": rhs,
        "offsets": offsets,
        "alpha": alpha2,
        "num_classes": int(K),
        "n_channels": int(C),
        "k_pad": int(k_pad),
    }


def _default_block_b():
    """v5e: 128-row tiles (128x128 MXU, smallest scoped VMEM); otherwise 256."""
    try:
        kind = jax.devices()[0].device_kind.lower()
        if "v5 lite" in kind or "v5e" in kind or "v5lite" in kind:
            return 128
    except Exception:
        pass
    return 256


def _vmem_cap_bytes():
    try:
        cap = int(pltpu.get_tpu_info().vmem_capacity_bytes)
    except Exception:
        cap = 64 << 20                     # conservative (v7x-sized) fallback
    # ~48 MiB on a 64 MiB chip (v7x), ~96 MiB on 128 MiB chips (v5e/v6e).
    return (cap * 3) // 4


# ----------------------------------------------------------------------------
# Per-call forward wrapper.
# ----------------------------------------------------------------------------
def vim_forward(x, params, *, block_b=None, trim_output=True):
    """Pallas ViMBlock forward. x: (B, C) -> (B, K+1) f32 (or (B, K_pad) if
    trim_output=False, which skips the non-128-aligned output slice)."""
    B, C = x.shape
    assert C == params["n_channels"], "feature width mismatch"
    K = params["num_classes"]
    k_pad = params["k_pad"]
    rhs = params["rhs"]
    offsets = params["offsets"]
    alpha = params["alpha"]
    n_total = k_pad + C
    compute_dtype = rhs.dtype

    # --- batch tiling: balanced tiles, >=2 grid steps whenever B allows so the
    # "parallel" axis can be split across v7x's two TensorCores and the x-tile
    # DMA overlaps compute.  Ragged last block handled by Pallas (garbage rows
    # only feed their own never-written-back output rows); NO jnp.pad of x. ---
    if block_b is None:
        block_b = _default_block_b()
    n_tiles = _cdiv(B, block_b)
    if B > 8:
        n_tiles = max(n_tiles, 2)
    tb = min(_round_up(_cdiv(B, n_tiles), 8), _round_up(B, 8))
    grid = (_cdiv(B, tb),)

    # --- VMEM budget: double-buffered x / rhs / offsets / out tiles PLUS the
    # implicit f32 matmul-result buffer and epilogue temporaries; capped per chip.
    cbytes = jnp.dtype(compute_dtype).itemsize
    xbytes = jnp.dtype(x.dtype).itemsize
    vmem_need = (
        2 * tb * C * xbytes            # x tile (double-buffered)
        + tb * C * cbytes              # in-kernel bf16 cast of x
        + 2 * C * n_total * cbytes     # fused rhs (grid-invariant, still 2 bufs;
                                       #   pl.Buffered(1) would halve this)
        + 2 * n_total * 4              # offsets row
        + 2 * tb * k_pad * 4           # output tile (double-buffered)
        + 2 * tb * n_total * 4         # implicit f32 dot result + epilogue temps
        + (2 << 20)                    # headroom
    )
    vmem_limit = int(min(max(vmem_need, 16 << 20), _vmem_cap_bytes()))
    # NOTE: for very large C the full (C, K_pad+C) rhs may not fit under the v7x
    # cap; in that case tile the C (reduction) dim with a second "arbitrary"
    # grid axis + an f32 accumulator scratch.  Unnecessary at these sizes.

    rows = grid[0] * tb
    cost = pl.CostEstimate(
        flops=2 * rows * C * n_total,
        transcendentals=rows,
        bytes_accessed=(B * C * xbytes + C * n_total * cbytes
                        + n_total * 4 + B * k_pad * 4))

    out = pl.pallas_call(
        functools.partial(_vim_kernel, num_classes=K, k_pad=k_pad,
                          compute_dtype=compute_dtype),
        out_shape=jax.ShapeDtypeStruct((B, k_pad), jnp.float32),
        grid=grid,
        in_specs=[
            pl.BlockSpec((tb, C), lambda i: (i, 0)),              # x tile
            pl.BlockSpec((C, n_total), lambda i: (0, 0)),         # [W.T | OS]
            pl.BlockSpec((1, n_total), lambda i: (0, 0)),         # [b | -u@OS]
            pl.BlockSpec(memory_space=pltpu.MemorySpace.SMEM),    # alpha scalar
        ],
        out_specs=pl.BlockSpec((tb, k_pad), lambda i: (i, 0)),    # lane-dense out
        compiler_params=pltpu.CompilerParams(
            dimension_semantics=("parallel",),
            vmem_limit_bytes=vmem_limit),
        cost_estimate=cost,
    )(x, rhs, offsets, alpha)

    if trim_output:
        # Module semantics: (B, K+1). Callers that can consume the padded slab
        # may pass trim_output=False to skip this relayout.
        out = out[:, :K + 1]
    return out


# ----------------------------------------------------------------------------
# Init-time glue: deterministic parameters + ViM fit (update_vim_parameters).
# ----------------------------------------------------------------------------
def compute_orthogonal_space(matrix, threshold):
    """PCA(n_components=None).fit(matrix); zero components whose cumulative
    explained-variance ratio is <= threshold. Returns (D, D)."""
    n = matrix.shape[0]
    mean = jnp.mean(matrix, axis=0, keepdims=True)
    xc = matrix - mean
    _, s, vt = jnp.linalg.svd(xc, full_matrices=False)     # vt: (D, D) (n >= D)
    explained_variance = (s ** 2) / (n - 1)
    ratio = explained_variance / jnp.sum(explained_variance)
    cum = jnp.cumsum(ratio)
    mask = (cum <= threshold)[:, None]
    return jnp.where(mask, 0.0, vt)


def init_vim_params(key, num_classes, n_channels, penultimate,
                    threshold=0.982, is_using_vim=True):
    kw, kb = jax.random.split(key)
    bound = 1.0 / math.sqrt(n_channels)                    # nn.Linear default
    w = jax.random.uniform(kw, (num_classes, n_channels), jnp.float32,
                           -bound, bound)
    b = jax.random.uniform(kb, (num_classes,), jnp.float32, -bound, bound)

    u = -(jnp.linalg.pinv(w) @ b)                          # (C,)
    logit_id_train = penultimate @ w.T + b                 # (N, K)
    centered = penultimate - u                             # (N, C)
    orthogonal_space = compute_orthogonal_space(centered, threshold)  # (C, C)
    max_logit = jnp.max(logit_id_train, axis=-1)
    vlogit_id_training = jnp.linalg.norm(centered @ orthogonal_space, axis=-1)
    alpha = jnp.sum(max_logit) / jnp.sum(vlogit_id_training)
    if not is_using_vim:
        alpha = alpha - jnp.abs(alpha) * 1000.0
    return w, b, u, orthogonal_space, alpha


def vim_forward_ref(x, w, b, u, orthogonal_space, alpha):
    out = x @ w.T + b
    vlogit = jnp.linalg.norm((x - u) @ orthogonal_space, axis=-1) * alpha
    return jnp.concatenate([out, vlogit[:, None]], axis=1)


if __name__ == "__main__":
    num_classes = 10
    n_channels = 32
    n_train = 64
    batch = 8

    key = jax.random.PRNGKey(0)
    k_pen, k_x, k_params = jax.random.split(key, 3)
    penultimate = jax.random.normal(k_pen, (n_train, n_channels), jnp.float32)
    x = jax.random.normal(k_x, (batch, n_channels), jnp.float32)

    w, b, u, orthogonal_space, alpha = init_vim_params(
        k_params, num_classes, n_channels, penultimate)

    ref = vim_forward_ref(x, w, b, u, orthogonal_space, alpha)

    # (1) f32 numerics mode: matches the PyTorch module's compute dtype; tight check.
    params_f32 = prepare_vim_params(w, b, u, orthogonal_space, alpha,
                                    compute_dtype=jnp.float32)
    out_f32 = jax.block_until_ready(vim_forward(x, params_f32))
    assert out_f32.shape == (batch, num_classes + 1)
    assert jnp.allclose(out_f32, ref, atol=1e-3, rtol=1e-3), (
        f"f32 mismatch: max abs err {float(jnp.max(jnp.abs(out_f32 - ref)))}")

    # (2) Default bf16 MXU mode (f32 accumulation). bf16 operand rounding shifts
    #     results by ~1e-2 relative at most; tolerance loosened accordingly.
    params_bf16 = prepare_vim_params(w, b, u, orthogonal_space, alpha)
    out_bf16 = jax.block_until_ready(vim_forward(x, params_bf16))
    assert out_bf16.shape == (batch, num_classes + 1)
    assert jnp.allclose(out_bf16, ref, atol=5e-2, rtol=5e-2), (
        f"bf16 mismatch: max abs err {float(jnp.max(jnp.abs(out_bf16 - ref)))}")

    print("KERNEL_OK")
</pallas_src>

<mosaic_0001>
module attributes {stable_mosaic.version = 11 : i64} {
  func.func @_vim_kernel(%arg0: i32, %arg1: memref<8x32xf32, #tpu.memory_space<vmem>>, %arg2: memref<32x160xf32, #tpu.memory_space<vmem>>, %arg3: memref<1x160xf32, #tpu.memory_space<vmem>>, %arg4: memref<1x1xf32, #tpu.memory_space<smem>>, %arg5: memref<8x128xf32, #tpu.memory_space<vmem>>) attributes {dimension_semantics = [#tpu.dimension_semantics<parallel>], iteration_bounds = array<i64: 1>, scalar_prefetch = 0 : i64, scratch_operands = 0 : i64, tpu.core_type = #tpu.core_type<tc>, window_params = [{transform_indices = @transform_0, window_bounds = array<i64: 8, 32>}, {pipeline_mode = #tpu.pipeline_mode<synchronous>, transform_indices = @transform_1, window_bounds = array<i64: 32, 160>}, {pipeline_mode = #tpu.pipeline_mode<synchronous>, transform_indices = @transform_2, window_bounds = array<i64: 1, 160>}, {transform_indices = @transform_3, window_bounds = array<i64: 1, 1>}, {transform_indices = @transform_4, window_bounds = array<i64: 8, 128>}]} {
    %c0 = arith.constant 0 : index
    %c0_0 = arith.constant 0 : index
    %0 = vector.load %arg1[%c0, %c0_0] : memref<8x32xf32, #tpu.memory_space<vmem>>, vector<8x32xf32>
    %c0_1 = arith.constant 0 : index
    %c0_2 = arith.constant 0 : index
    %1 = vector.load %arg2[%c0_1, %c0_2] : memref<32x160xf32, #tpu.memory_space<vmem>>, vector<32x160xf32>
    %cst = arith.constant dense<0.000000e+00> : vector<8x160xf32>
    %2 = tpu.matmul %0, %1, %cst {dimension_numbers = #tpu.dot_dimension_numbers<[1], [0], [0], [1], [0, 0, 1, 1], [], []>} : vector<8x32xf32>, vector<32x160xf32>, vector<8x160xf32> -> vector<8x160xf32>
    %c0_3 = arith.constant 0 : index
    %c0_4 = arith.constant 0 : index
    %3 = vector.load %arg3[%c0_3, %c0_4] : memref<1x160xf32, #tpu.memory_space<vmem>>, vector<1x160xf32>
    %4 = vector.broadcast %3 : vector<1x160xf32> to vector<8x160xf32>
    %5 = arith.addf %2, %4 : vector<8x160xf32>
    %6 = vector.extract_strided_slice %5 {offsets = [0, 128], sizes = [8, 32], strides = [1, 1]} : vector<8x160xf32> to vector<8x32xf32>
    %7 = arith.mulf %6, %6 : vector<8x32xf32>
    %cst_5 = arith.constant dense<0.000000e+00> : vector<8xf32>
    %8 = vector.multi_reduction <add>, %7, %cst_5 [1] : vector<8x32xf32> to vector<8xf32>
    %9 = vector.shape_cast %8 : vector<8xf32> to vector<8x1xf32>
    %10 = math.sqrt %9 : vector<8x1xf32>
    %c0_6 = arith.constant 0 : index
    %c0_7 = arith.constant 0 : index
    %11 = memref.load %arg4[%c0_6, %c0_7] : memref<1x1xf32, #tpu.memory_space<smem>>
    %12 = vector.broadcast %11 : f32 to vector<8x1xf32>
    %13 = arith.mulf %10, %12 : vector<8x1xf32>
    %14 = vector.extract_strided_slice %5 {offsets = [0, 0], sizes = [8, 128], strides = [1, 1]} : vector<8x160xf32> to vector<8x128xf32>
    %c0_8 = arith.constant 0 : index
    %c0_9 = arith.constant 0 : index
    %15 = vector.load %arg5[%c0_8, %c0_9] : memref<8x128xf32, #tpu.memory_space<vmem>>, vector<8x128xf32>
    tpu.vector_store %arg5[%c0_8, %c0_9], %14 {strides = array<i32>} : memref<8x128xf32, #tpu.memory_space<vmem>>, vector<8x128xf32>,
    %c0_10 = arith.constant 0 : index
    %c10 = arith.constant 10 : index
    %16 = vector.load %arg5[%c0_10, %c10] : memref<8x128xf32, #tpu.memory_space<vmem>>, vector<8x1xf32>
    tpu.vector_store %arg5[%c0_10, %c10], %13 {strides = array<i32>} : memref<8x128xf32, #tpu.memory_space<vmem>>, vector<8x1xf32>,
    return
  }
  func.func @transform_0(%arg0: i32) -> (i32, i32) {
    %c0_i32 = arith.constant 0 : i32
    %c0_i32_0 = arith.constant 0 : i32
    return %arg0, %c0_i32 : i32, i32
  }
  func.func @transform_1(%arg0: i32) -> (i32, i32) {
    %c0_i32 = arith.constant 0 : i32
    %c0_i32_0 = arith.constant 0 : i32
    %c0_i32_1 = arith.constant 0 : i32
    return %c0_i32, %c0_i32_0 : i32, i32
  }
  func.func @transform_2(%arg0: i32) -> (i32, i32) {
    %c0_i32 = arith.constant 0 : i32
    %c0_i32_0 = arith.constant 0 : i32
    %c0_i32_1 = arith.constant 0 : i32
    return %c0_i32, %c0_i32_0 : i32, i32
  }
  func.func @transform_3(%arg0: i32) -> (i32, i32) {
    %c0_i32 = arith.constant 0 : i32
    %c0_i32_0 = arith.constant 0 : i32
    %c0_i32_1 = arith.constant 0 : i32
    return %c0_i32, %c0_i32_0 : i32, i32
  }
  func.func @transform_4(%arg0: i32) -> (i32, i32) {
    %c0_i32 = arith.constant 0 : i32
    %c0_i32_0 = arith.constant 0 : i32
    return %arg0, %c0_i32 : i32, i32
  }
}

</mosaic_0001>

<llo_original>
// kernel: tpu_custom_call.1
$region0: #{tpu_custom_call.1}
  #allocation0 [shape = 'u32[]', space=smem, size = 0x4, offset = 0x4, fixed_abs, tag = 'smem constant byte address 0x4 - core index']
  #allocation1 [shape = 'u32[144,128]{1,0:T(1,128)}', space=vmem, size = 0x12000, scoped, tag = 'internal scratch']
  #allocation2 [shape = 'f32[1,1]{1,0:T(1,128)S(6)}', space=smem, size = 0x200, scoped, tag = 'scoped memory for tpu_custom_call.1']
  %s0 = inlined_call_operand.hbm [shape: f32[8,32], index: 0, kind: input, shape index: {}]
  %s1 = inlined_call_operand.hbm [shape: f32[32,160], index: 1, kind: input, shape index: {}]
  %s2 = inlined_call_operand.vmem [shape: f32[1,160], index: 2, kind: input, shape index: {}]
  %s3 = inlined_call_operand.<no memory space> [shape: f32[1,1], index: 3, kind: input, shape index: {}]
  %s4 = inlined_call_operand.hbm [shape: f32[8,128], index: 4, kind: output, shape index: {}]
  %s5 = sld [smem:[#allocation0]]
  $region34: #{tpu_custom_call.1} parent=0
    _
  %s7 = ssub.s32 1, %s5
  %s8 = scalar_select 0, %s7, %s5
  %9 = sst [smem:[#allocation2]] %s3
  $region1: #{tpu_custom_call.1} parent=0
    #allocation3 [shape = 'u8[4096]{0}', space=vmem, size = 0x1000, scoped, tag = 'input window, operand 0, single buffered']
    #allocation4 [shape = 's32[1]{0}', space=sflag, size = 0x4, scoped, tag = 'scoped memory for tpu_custom_call.1']
    #allocation5 [shape = 's32[1]{0}', space=sflag, size = 0x4, scoped, tag = 'scoped memory for tpu_custom_call.1']
    #allocation6 [shape = 'u8[32768]{0}', space=vmem, size = 0x8000, scoped, tag = 'input window, operand 1, single buffered']
    #allocation7 [shape = 's32[1]{0}', space=sflag, size = 0x4, scoped, tag = 'scoped memory for tpu_custom_call.1']
    #allocation8 [shape = 'u8[4096]{0}', space=vmem, size = 0x1000, scoped, tag = 'output window, operand 0, single buffered']
    %10 = vsyncpa [#allocation4], 0
    %11 = vsyncpa [#allocation7], 0
    %12 = vsyncpa [#allocation5], 0
    // Predicated region
    $region2: #{tpu_custom_call.1} parent=1 // pred_check
      _
    $region3: #{tpu_custom_call.1} parent=1 // pred_check_branch
      %14 = sbr.rel (0) target = $region5
    $region4: #{tpu_custom_call.1} parent=1 // pred_region
      %s16 = ssub.s32 128, 128
      %17 = vsyncadd [#allocation4], %s16
      %s19 = sshll.u32 [#allocation3], 4
      %s20 = int_to_ptr.vmem [resolvable:$true] %s19
      %22 = dma.hbm_to_vmem [thread:$0]  %s0, 128, %s20, [#allocation4]
    $region5: #{tpu_custom_call.1} parent=1 // pred_fallthru
      _
    // Predicated region
    $region6: #{tpu_custom_call.1} parent=1 // pred_check
      _
    $region7: #{tpu_custom_call.1} parent=1 // pred_check_branch
      %24 = sbr.rel (0) target = $region9
    $region8: #{tpu_custom_call.1} parent=1 // pred_region
      %s26 = ssub.s32 1024, 1024
      %27 = vsyncadd [#allocation7], %s26
      %s28 = sshll.u32 [#allocation6], 4
      %s29 = int_to_ptr.vmem [resolvable:$true] %s28
      %34 = dma.hbm_to_vmem [thread:$0]  %s1, 1024, %s29, [#allocation7], 256, 256, 16
    $region9: #{tpu_custom_call.1} parent=1 // pred_fallthru
      _
    // Predicated region
    $region10: #{tpu_custom_call.1} parent=1 // pred_check
      _
    $region11: #{tpu_custom_call.1} parent=1 // pred_check_branch
      %36 = sbr.rel (0) target = $region13
    $region12: #{tpu_custom_call.1} parent=1 // pred_region
      _
    $region13: #{tpu_custom_call.1} parent=1 // pred_fallthru
      _
    // Predicated region
    $region14: #{tpu_custom_call.1} parent=1 // pred_check
      _
    $region15: #{tpu_custom_call.1} parent=1 // pred_check_branch
      %38 = sbr.rel (0) target = $region17
    $region16: #{tpu_custom_call.1} parent=1 // pred_region
      _
    $region17: #{tpu_custom_call.1} parent=1 // pred_fallthru
      _
    // Predicated region
    $region18: #{tpu_custom_call.1} parent=1 // pred_check
      _
    $region19: #{tpu_custom_call.1} parent=1 // pred_check_branch
      %40 = sbr.rel (0) target = $region21
    $region20: #{tpu_custom_call.1} parent=1 // pred_region
      %41 = dma.done [#allocation4], 128
    $region21: #{tpu_custom_call.1} parent=1 // pred_fallthru
      _
    // Predicated region
    $region22: #{tpu_custom_call.1} parent=1 // pred_check
      _
    $region23: #{tpu_custom_call.1} parent=1 // pred_check_branch
      %43 = sbr.rel (0) target = $region25
    $region24: #{tpu_custom_call.1} parent=1 // pred_region
      %44 = dma.done [#allocation7], 1024
    $region25: #{tpu_custom_call.1} parent=1 // pred_fallthru
      _
    %v45 = vld [vmem:[#allocation3] sm:$0xff]
    %v46 = vld [vmem:[#allocation6] sm:$0xff]
    %v47 = vld [vmem:[#allocation6 + $0x8] sm:$0xff]
    %v48 = vld [vmem:[#allocation6 + $0x10] sm:$0xff]
    %v49 = vld [vmem:[#allocation6 + $0x18] sm:$0xff]
    %v50 = vld [vmem:[#allocation6 + $0x20] sm:$0xff]
    %v51 = vld [vmem:[#allocation6 + $0x28] sm:$0xff]
    %v52 = vld [vmem:[#allocation6 + $0x30] sm:$0xff]
    %v53 = vld [vmem:[#allocation6 + $0x38] sm:$0xff]
    %v54 = vld [vmem:[%s2] sm:$0x3]
    %v56 = vlaneseq
    %v57 = vshrl.u32 %v56, 7
    %v58 = vsub.s32 0, %v57
    %v59 = vrot.slane %v54, %v58
    %v60 = vlaneseq
    %v61 = vshrl.u32 %v60, 7
    %v62 = vsub.s32 1, %v61
    %v63 = vrot.slane %v54, %v62
    %vm66 = vcmask 261120
    %v68 = vsel %vm66, %v45, 0
    %70 = vmatprep.subr.mxu0 0.0
    %71 = vmatpush1.msra.mxu0 0.0
    %72 = vmatprep.subr.mxu0 0.0
    %73 = vmatpush1.msra.mxu0 0.0
    %74 = vmatprep.subr.mxu0 0.0
    %75 = vmatpush1.msra.mxu0 0.0
    %76 = vmatprep.subr.mxu0 0.0
    %77 = vmatpush1.msra.mxu0 0.0
    %78 = vmatprep.subr.mxu0 0.0
    %79 = vmatpush1.msra.mxu0 0.0
    %80 = vmatprep.subr.mxu0 0.0
    %81 = vmatpush1.msra.mxu0 0.0
    %82 = vmatprep.subr.mxu0 0.0
    %83 = vmatpush1.msra.mxu0 0.0
    %84 = vmatprep.subr.mxu0 0.0
    %85 = vmatpush1.msra.mxu0 0.0
    %86 = vmatprep.subr.mxu0 0.0
    %87 = vmatpush1.msra.mxu0 0.0
    %88 = vmatprep.subr.mxu0 0.0
    %89 = vmatpush1.msra.mxu0 0.0
    %90 = vmatprep.subr.mxu0 0.0
    %91 = vmatpush1.msra.mxu0 0.0
    %92 = vmatprep.subr.mxu0 0.0
    %93 = vmatpush1.msra.mxu0 0.0
    %94 = vmatprep.subr.mxu0 %v53
    %95 = vmatpush1.msra.mxu0 %v52
    %96 = vmatprep.subr.mxu0 %v51
    %97 = vmatpush1.msra.mxu0 %v50
    %98 = vmatprep.subr.mxu0 %v49
    %99 = vmatpush1.msra.mxu0 %v48
    %100 = vmatprep.subr.mxu0 %v47
    %101 = vmatpush1.msra.mxu0 %v46
    %102 = vmatprep.subr.mxu0 0.0
    %103 = vmatpush2.msra.mxu0 0.0
    %104 = vmatprep.subr.mxu0 0.0
    %105 = vmatpush2.msra.mxu0 0.0
    %106 = vmatprep.subr.mxu0 0.0
    %107 = vmatpush2.msra.mxu0 0.0
    %108 = vmatprep.subr.mxu0 0.0
    %109 = vmatpush2.msra.mxu0 0.0
    %110 = vmatprep.subr.mxu0 0.0
    %111 = vmatpush2.msra.mxu0 0.0
    %112 = vmatprep.subr.mxu0 0.0
    %113 = vmatpush2.msra.mxu0 0.0
    %114 = vmatprep.subr.mxu0 0.0
    %115 = vmatpush2.msra.mxu0 0.0
    %116 = vmatprep.subr.mxu0 0.0
    %117 = vmatpush2.msra.mxu0 0.0
    %118 = vmatprep.subr.mxu0 0.0
    %119 = vmatpush2.msra.mxu0 0.0
    %120 = vmatprep.subr.mxu0 0.0
    %121 = vmatpush2.msra.mxu0 0.0
    %122 = vmatprep.subr.mxu0 0.0
    %123 = vmatpush2.msra.mxu0 0.0
    %124 = vmatprep.subr.mxu0 0.0
    %125 = vmatpush2.msra.mxu0 0.0
    %126 = vmatprep.subr.mxu0 0.0
    %127 = vmatpush2.msra.mxu0 0.0
    %128 = vmatprep.subr.mxu0 0.0
    %129 = vmatpush2.msra.mxu0 0.0
    %130 = vmatprep.subr.mxu0 0.0
    %131 = vmatpush2.msra.mxu0 0.0
    %132 = vmatprep.subr.mxu0 0.0
    %133 = vmatpush2.msra.mxu0 0.0
    %134 = vmatprep.mubr.f32.mxu0 0.0
    %135 = vmatmul.mubr.f32.gmra.mxu0 %v68
    %v136 = vpop.f32.mrf.mxu0
    %v137 = vadd.f32 %v59, %v136
    %v138 = vpop.f32.mrf.mxu0
    %v139 = vadd.f32 %v63, %v138
    %140 = vdwg.mxu0
    %v141 = vmul.f32 %v139, %v139
    %v142 = vsel %vm66, %v141, 0.0
    %143 = vadd.xlane.f32.xlu0 %v142
    %v144 = vpop.xlane.xlu0 %143
    %v145 = vrsqrt.pop %v144
    %v146 = vmul.f32 %v144, %v145
    %vm147 = vcmp.eq.f32.partialorder %v144, inf
    %v148 = vsel %vm147, %v144, %v146
    %vm149 = vcmp.eq.f32.partialorder %v144, 0.0
    %v150 = vand.u32 %v144, 2147483648
    %v151 = vsel %vm149, %v150, %v148
    %s152 = sld [smem:[#allocation2]]
    %v153 = vstv %s152
    %v154 = vmul.f32 %v151, %v153
    %155 = vst [vmem:[#allocation8] sm:$0xff] %v137
    %vm156 = vcmask 89168
    %157 = vst.msk [vmem:[#allocation8] sm:$0xff] %vm156, %v154
    // Predicated region
    $region26: #{tpu_custom_call.1} parent=1 // pred_check
      _
    $region27: #{tpu_custom_call.1} parent=1 // pred_check_branch
      %159 = sbr.rel (0) target = $region29
    $region28: #{tpu_custom_call.1} parent=1 // pred_region
      %s161 = ssub.s32 128, 128
      %162 = vsyncadd [#allocation5], %s161
      %s164 = sshll.u32 [#allocation8], 4
      %s165 = int_to_ptr.vmem [resolvable:$true] %s164
      %167 = dma.vmem_to_hbm [thread:$0]  %s165, 128, %s4, [#allocation5]
    $region29: #{tpu_custom_call.1} parent=1 // pred_fallthru
      _
    // Predicated region
    $region30: #{tpu_custom_call.1} parent=1 // pred_check
      _
    $region31: #{tpu_custom_call.1} parent=1 // pred_check_branch
      %169 = sbr.rel (0) target = $region33
    $region32: #{tpu_custom_call.1} parent=1 // pred_region
      %170 = dma.done [#allocation5], 128
    $region33: #{tpu_custom_call.1} parent=1 // pred_fallthru
      _
    %171 = vsyncpa [#allocation4], 1
    %172 = vsyncpa [#allocation7], 1
    %173 = vsyncpa [#allocation5], 1

</llo_original>
